<compile_context>
chip_gen: v6e
topology: v6e:2x2x1
jax: 0.10.0
libtpu: 0.0.40
codegen_flags: <defaults>
</compile_context>

<pallas_src>
import jax
import jax.numpy as jnp
from jax import lax
from jax.experimental import pallas as pl
from jax.experimental.pallas import tpu as pltpu


# ----------------------------------------------------------------------------
# Pallas kernels
# ----------------------------------------------------------------------------
def _l1_kernel(th_ref, ps_ref, o_ref):
    """L1 builder (init-time only).
    th_ref: [2, 2P, Nn] real/imag planes of [Theta; Theta_symm]
    ps_ref: [2P, Kk]    psi^T stacked twice (real)
    o_ref : [2, 2P, Nn, Kk] -> contiguous reshape to [2, 2P, Nn*Kk] outside."""
    ps = ps_ref[...]
    o_ref[0] = th_ref[0][:, :, None] * ps[:, None, :]
    o_ref[1] = th_ref[1][:, :, None] * ps[:, None, :]


def _make_eta_gest_kernel(NnKk, twoP):
    """Row-streaming kernel: eta^T and g_est^T for one tile of g_t rows.

    x_ref  : [TR, 2P]       bf16, real rows of g_t
    a1_ref : [2P, 2*NnKk]   bf16, [Re(pinv(L1))^T | Im(pinv(L1))^T]
    a2_ref : [NnKk, 2*2P]   bf16, [Re(L1)^T       | Im(L1)^T]
    eta_ref: [TR, 2*NnKk]   f32,  [Re(eta^T)   | Im(eta^T)]   (lane packed)
    g_ref  : [TR, 2*2P]     f32,  [Re(g_est^T) | Im(g_est^T)]"""

    def kernel(x_ref, a1_ref, a2_ref, eta_ref, g_ref):
        f32 = jnp.float32
        # eta^T: real x complex -> ONE wide dot, already in the packed output
        # layout, stored with a single lane-dense store.
        E = jnp.dot(x_ref[...], a1_ref[...], preferred_element_type=f32)
        eta_ref[...] = E

        # g_est^T = eta^T @ L1^T: complex x complex via two wide dots
        #   X1 = Re(eta) @ [Re|Im],  X2 = Im(eta) @ [Re|Im]
        #   Re = X1[:, :2P] - X2[:, 2P:],  Im = X1[:, 2P:] + X2[:, :2P]
        Eb = E.astype(jnp.bfloat16)            # keep the MXU on native bf16
        er, ei = Eb[:, :NnKk], Eb[:, NnKk:]
        a2 = a2_ref[...]
        X1 = jnp.dot(er, a2, preferred_element_type=f32)
        X2 = jnp.dot(ei, a2, preferred_element_type=f32)
        gr = X1[:, :twoP] - X2[:, twoP:]
        gi = X1[:, twoP:] + X2[:, :twoP]
        g_ref[...] = jnp.concatenate([gr, gi], axis=-1)

    return kernel


def _make_bf_kernel(Nn, Kk, P, PI):
    """Tiny kernel for b and f_pol (torch computes them from eta[0, 0] only).

    e0_ref : [M, 2*NnKk]   f32, first-batch rows of the packed eta^T output
    psi_ref: [Kk, P]       f32
    fm_ref : [NnKk, 2*PI]  f32, [Re(Fm)|Im(Fm)], Fm[nk, p*I+i]=Theta[p,n]*psi[k,ci]
    b_ref  : [M, 2*Nn*P]   f32, [Re | Im], n-major / p-minor
    f_ref  : [M, 2*PI]     f32, [Re | Im]"""
    NnKk = Nn * Kk

    def kernel(e0_ref, psi_ref, fm_ref, b_ref, f_ref):
        f32 = jnp.float32
        e0 = e0_ref[...]
        e0r, e0i = e0[:, :NnKk], e0[:, NnKk:]

        # b: exploit the block-diagonal (kron) structure -> Nn small dots with
        # psi[Kk, P] instead of a dot against kron(I_Nn, psi) [NnKk, Nn*P].
        psi = psi_ref[...]
        parts = []
        for comp in (e0r, e0i):
            for n in range(Nn):
                parts.append(jnp.dot(comp[:, n * Kk:(n + 1) * Kk], psi,
                                     preferred_element_type=f32))
        b_ref[...] = jnp.concatenate(parts, axis=-1)

        # f_pol = eta00^T @ Fm: complex x complex via two wide dots.
        fm = fm_ref[...]
        F1 = jnp.dot(e0r, fm, preferred_element_type=f32)
        F2 = jnp.dot(e0i, fm, preferred_element_type=f32)
        fr = F1[:, :PI] - F2[:, PI:]
        fi = F1[:, PI:] + F2[:, :PI]
        f_ref[...] = jnp.concatenate([fr, fi], axis=-1)

    return kernel


# ----------------------------------------------------------------------------
# pallas_call wrappers
# ----------------------------------------------------------------------------
def _pick_row_tile(R, requested=None):
    """Prefer multiple grid steps of up to 1024 rows (keeps the software
    pipeline busy); TR % 16 == 0 for bf16 sublane packing, or TR == R."""
    if requested is None:
        TR = R
        for cand in (1024, 512, 256, 128, 64, 32, 16):
            if R % cand == 0 and R // cand >= 2:
                TR = cand
                break
    else:
        TR = requested
    assert R % TR == 0
    assert TR == R or TR % 16 == 0, "row tile must be a multiple of 16 (bf16)"
    return TR


def eta_gest_forward(x_rows, a1, a2, *, NnKk, twoP, row_tile=None):
    """eta^T and g_est^T for all g_t rows.  x_rows [R, 2P] bf16;
    a1 [2P, 2*NnKk], a2 [NnKk, 2*2P] bf16, lane-packed [Re | Im]."""
    R = x_rows.shape[0]
    TR = _pick_row_tile(R, row_tile)

    flops = int(2 * R * twoP * (2 * NnKk)           # eta   (one wide dot)
                + 2 * (2 * R * NnKk * (2 * twoP)))  # g_est (two wide dots)
    bytes_acc = int(2 * (x_rows.size + a1.size + a2.size)
                    + 4 * (R * 2 * NnKk + R * 2 * twoP))

    out_shapes = (
        jax.ShapeDtypeStruct((R, 2 * NnKk), jnp.float32),   # eta^T   [Re | Im]
        jax.ShapeDtypeStruct((R, 2 * twoP), jnp.float32),   # g_est^T [Re | Im]
    )
    in_specs = [
        pl.BlockSpec((TR, twoP), lambda i: (i, 0)),
        pl.BlockSpec((twoP, 2 * NnKk), lambda i: (0, 0)),   # shared, VMEM-resident
        pl.BlockSpec((NnKk, 2 * twoP), lambda i: (0, 0)),   # shared, VMEM-resident
    ]
    out_specs = (
        pl.BlockSpec((TR, 2 * NnKk), lambda i: (i, 0)),
        pl.BlockSpec((TR, 2 * twoP), lambda i: (i, 0)),
    )
    # Default scoped VMEM is ample at these tile widths; if TR / packed widths
    # grow, raise pltpu.CompilerParams(vmem_limit_bytes=...) (v7x: <= ~48 MiB).
    return pl.pallas_call(
        _make_eta_gest_kernel(NnKk, twoP),
        out_shape=out_shapes,
        grid=(R // TR,),
        in_specs=in_specs,
        out_specs=out_specs,
        compiler_params=pltpu.CompilerParams(
            dimension_semantics=("parallel",)),   # no step-0 special case left
        cost_estimate=pl.CostEstimate(flops=flops, transcendentals=0,
                                      bytes_accessed=bytes_acc),
    )(x_rows, a1, a2)


def bf_forward(e0_pack, psi32, fm, *, Nn, Kk, P, I):
    """b and f_pol from the first-batch eta rows (tiny, runs once, f32)."""
    M = e0_pack.shape[0]
    NnP, PI = Nn * P, P * I
    out_shapes = (
        jax.ShapeDtypeStruct((M, 2 * NnP), jnp.float32),
        jax.ShapeDtypeStruct((M, 2 * PI), jnp.float32),
    )
    return pl.pallas_call(
        _make_bf_kernel(Nn, Kk, P, PI),
        out_shape=out_shapes,
    )(e0_pack, psi32, fm)


# ----------------------------------------------------------------------------
# Parameter-only precompute (hoisted out of the hot path)
# ----------------------------------------------------------------------------
def _pinv_complex(C):
    """Moore-Penrose pinv of a complex matrix via its real block embedding."""
    # TODO(synk): pinv/SVD has no clean Pallas equivalent; computed once at
    # init in plain JAX (parameter-only, not in the forward hot path).
    Cr, Ci = jnp.real(C), jnp.imag(C)
    m, n = C.shape
    R = jnp.block([[Cr, -Ci], [Ci, Cr]])
    Rp = jnp.linalg.pinv(R)
    return jax.lax.complex(Rp[:n, :m], Rp[n:, :m])


def linear_interp_matrix(l_in, l_out):
    """W s.t. x @ W == F.interpolate(x, size=l_out, mode='linear',
    align_corners=False) for x of shape [..., l_in]."""
    p = jnp.arange(l_out, dtype=jnp.float32)
    src = jnp.clip((p + 0.5) * (l_in / l_out) - 0.5, 0.0, float(l_in - 1))
    i0 = jnp.floor(src).astype(jnp.int32)
    i1 = jnp.minimum(i0 + 1, l_in - 1)
    w = src - i0.astype(jnp.float32)
    cols = jnp.arange(l_out)
    W = jnp.zeros((l_in, l_out), jnp.float32)
    W = W.at[i0, cols].add(1.0 - w)
    W = W.at[i1, cols].add(w)
    return W


def build_L1(theta_pn, theta_symm_pn, psi):
    """L1[q, n*(K+1)+k] = Theta_(q<P ? '' : 'symm')[q mod P, n] * psi[k, q mod P]."""
    P, Nn = theta_pn.shape
    Kk = psi.shape[0]
    th2 = jnp.concatenate([theta_pn, theta_symm_pn], axis=0)               # [2P, Nn]
    th2_ri = jnp.stack([jnp.real(th2), jnp.imag(th2)]).astype(jnp.float32)
    psT2 = jnp.concatenate([psi.T, psi.T], axis=0).astype(jnp.float32)     # [2P, Kk]
    out = pl.pallas_call(
        _l1_kernel,
        out_shape=jax.ShapeDtypeStruct((2, 2 * P, Nn, Kk), jnp.float32),
    )(th2_ri, psT2)
    out = out.reshape(2, 2 * P, Nn * Kk)            # contiguous, no transpose
    return jax.lax.complex(out[0], out[1])


def precompute_operators(params):
    """Everything that depends only on parameters: psi, L1, pinv(L1) and the
    lane-packed operand planes consumed by the forward kernels."""
    P, N, K = params['P'], params['N'], params['K']
    I = params['num_instances']
    Nn, Kk = 2 * N + 1, K + 1

    # psi: linear interpolation of temporal_fcts as one real matmul (hoisted).
    psi = jnp.matmul(params['temporal_fcts'][0], params['W'],
                     precision=jax.lax.Precision.HIGHEST)            # [Kk, P]

    L1 = build_L1(params['Theta_pn'], params['Theta_symm_pn'], psi)  # [2P, NnKk]
    pinvL1 = _pinv_complex(L1)                                       # [NnKk, 2P]

    # Lane-packed bf16 operands for the row-streaming kernel ([Re | Im]).
    a1 = jnp.concatenate([jnp.real(pinvL1).T, jnp.imag(pinvL1).T],
                         axis=-1).astype(jnp.bfloat16)               # [2P, 2*NnKk]
    a2 = jnp.concatenate([jnp.real(L1).T, jnp.imag(L1).T],
                         axis=-1).astype(jnp.bfloat16)               # [NnKk, 2*2P]

    # f32 operands for the tiny b / f_pol kernel.
    psi32 = psi.astype(jnp.float32)                                  # [Kk, P]
    cols = jnp.array([i * P // I for i in range(I)])
    psi_sel = psi32[:, cols]                                         # [Kk, I]
    tr = jnp.real(params['Theta_pn']).astype(jnp.float32)
    ti = jnp.imag(params['Theta_pn']).astype(jnp.float32)
    fm_r = jnp.einsum('pn,ki->nkpi', tr, psi_sel).reshape(Nn * Kk, P * I)
    fm_i = jnp.einsum('pn,ki->nkpi', ti, psi_sel).reshape(Nn * Kk, P * I)
    fm = jnp.concatenate([fm_r, fm_i], axis=-1)                      # [NnKk, 2*P*I]

    return dict(psi=psi, L1=L1, pinvL1=pinvL1, a1=a1, a2=a2, psi32=psi32, fm=fm)


def init_params(P, N, K, num_instances, L_out, key):
    theta = jnp.linspace(0.0, jnp.pi, P, endpoint=False).astype(jnp.float32)
    n_idx = (jnp.arange(2 * N + 1) - N).astype(jnp.float32)
    theta_pn = jnp.exp(1j * theta[:, None] * n_idx[None, :]).astype(jnp.complex64)
    theta_symm_pn = jnp.exp(
        1j * (theta - jnp.pi)[:, None] * n_idx[None, :]).astype(jnp.complex64)
    temporal_fcts = jax.random.normal(key, (1, K + 1, L_out), dtype=jnp.float32)
    W = linear_interp_matrix(L_out, P)
    return dict(P=P, N=N, K=K, num_instances=num_instances, L_out=L_out,
                theta=theta, Theta_pn=theta_pn, Theta_symm_pn=theta_symm_pn,
                temporal_fcts=temporal_fcts, W=W)


# ----------------------------------------------------------------------------
# Forward pass
# ----------------------------------------------------------------------------
def series_expansion_forward(g_t, params, ops=None):
    if ops is None:                       # hoist this call out of the hot path
        ops = precompute_operators(params)
    P, N, K = params['P'], params['N'], params['K']
    I = params['num_instances']
    Nn, Kk = 2 * N + 1, K + 1
    NnKk = Nn * Kk

    # g_t is real; a complex g_t would silently lose its imaginary part here.
    assert not jnp.iscomplexobj(g_t), "series_expansion_forward expects real g_t"
    B1, B2, M, twoP = g_t.shape
    R = B1 * B2 * M

    # Main kernel over all rows (bf16 operands, f32 accumulation / outputs).
    x_rows = g_t.reshape(R, twoP).astype(jnp.bfloat16)
    eta_pack, gest_pack = eta_gest_forward(x_rows, ops['a1'], ops['a2'],
                                           NnKk=NnKk, twoP=twoP)

    # b / f_pol only use eta[0, 0] == the first M rows; run them in f32 off the
    # kernel's own eta output (separate call keeps the row axis "parallel").
    b_pack, f_pack = bf_forward(eta_pack[:M], ops['psi32'], ops['fm'],
                                Nn=Nn, Kk=Kk, P=P, I=I)

    # Assemble torch-layout complex outputs.  The complex interleave and the
    # eta^T -> eta transpose are the only post-kernel passes and are required
    # by the module's return contract.
    etaT = lax.complex(eta_pack[:, :NnKk],
                       eta_pack[:, NnKk:]).reshape(B1, B2, M, NnKk)
    eta = jnp.swapaxes(etaT, 2, 3)                        # [B1, B2, NnKk, M]
    g_est_T = lax.complex(gest_pack[:, :twoP],
                          gest_pack[:, twoP:]).reshape(B1, B2, M, twoP)
    NnP, PI = Nn * P, P * I
    b = lax.complex(b_pack[:, :NnP], b_pack[:, NnP:]).reshape(M, Nn, P)
    f_pol_est_s = lax.complex(f_pack[:, :PI], f_pack[:, PI:]).reshape(M, P, I)
    psi_mtx = ops['psi'][None].astype(jnp.complex64)

    return eta, ops['L1'], g_est_T, b, f_pol_est_s, psi_mtx


def _rel_err(a, b):
    return float(jnp.linalg.norm(a - b) / (jnp.linalg.norm(b) + 1e-12))


if __name__ == "__main__":
    P, N, K = 8, 2, 2
    num_instances, L_out = 4, 16
    B1, B2, M = 1, 1, 8

    key = jax.random.PRNGKey(0)
    k_tf, k_g = jax.random.split(key)
    params = init_params(P, N, K, num_instances, L_out, k_tf)
    ops = precompute_operators(params)            # parameter-only, done once
    g_t = jax.random.normal(k_g, (B1, B2, M, 2 * P), dtype=jnp.float32)

    outs = jax.block_until_ready(series_expansion_forward(g_t, params, ops))
    eta, L1, g_est_T, b, f_pol, psi_mtx = outs

    hp = jax.lax.Precision.HIGHEST
    c64 = jnp.complex64
    Nn, Kk = 2 * N + 1, K + 1
    NnKk, twoP = Nn * Kk, 2 * P

    # --- structural references (paths with no bf16 quantization) ------------
    psi_ref = jnp.matmul(params['temporal_fcts'][0], params['W'], precision=hp)
    L1_top = (params['Theta_pn'][:, :, None]
              * psi_ref.T[:, None, :]).reshape(P, NnKk)
    L1_bot = (params['Theta_symm_pn'][:, :, None]
              * psi_ref.T[:, None, :]).reshape(P, NnKk)
    L1_ref = jnp.concatenate([L1_top, L1_bot], axis=0)
    assert _rel_err(psi_mtx[0].real, psi_ref) < 1e-3
    assert _rel_err(L1, L1_ref) < 1e-4

    # --- eta vs. full precision (bf16 operand rounding only adds ~0.3%) -----
    g_c = g_t.astype(c64)
    eta_fp = jnp.matmul(ops['pinvL1'], jnp.swapaxes(g_c, 2, 3), precision=hp)
    assert _rel_err(eta, eta_fp) < 5e-2

    # --- matched-quantization references: rebuild the exact bf16 operands the
    #     kernels consumed so the comparison isolates the Pallas compute chain.
    a1f = ops['a1'].astype(jnp.float32)
    a2f = ops['a2'].astype(jnp.float32)
    pinvL1T_q = (a1f[:, :NnKk] + 1j * a1f[:, NnKk:]).astype(c64)   # [2P, NnKk]
    L1T_q = (a2f[:, :twoP] + 1j * a2f[:, twoP:]).astype(c64)       # [NnKk, 2P]
    x_q = g_t.reshape(B1 * B2 * M, twoP).astype(jnp.bfloat16).astype(jnp.float32)
    etaT_q = jnp.matmul(x_q.astype(c64), pinvL1T_q, precision=hp)
    eta_q = jnp.swapaxes(etaT_q.reshape(B1, B2, M, NnKk), 2, 3)
    assert _rel_err(eta, eta_q) < 1e-2

    # g_est: the kernel re-rounds eta to bf16 before the L1^T matmul; mirror it.
    etaT_k = jnp.swapaxes(eta, 2, 3).reshape(B1 * B2 * M, NnKk)
    etaT_b = (jnp.real(etaT_k).astype(jnp.bfloat16).astype(jnp.float32)
              + 1j * jnp.imag(etaT_k).astype(jnp.bfloat16).astype(jnp.float32)
              ).astype(c64)
    g_est_T_q = jnp.matmul(etaT_b, L1T_q, precision=hp).reshape(B1, B2, M, twoP)
    assert _rel_err(g_est_T, g_est_T_q) < 1e-2

    # b / f_pol run in f32 off the kernel's own eta[0, 0] rows.
    e00 = eta[0, 0]                                                 # [NnKk, M]
    b_ref = jnp.einsum('nkm,kp->mnp', e00.reshape(Nn, Kk, M),
                       ops['psi32'].astype(c64), precision=hp)
    cols = jnp.array([i * P // num_instances for i in range(num_instances)])
    f_ref = jnp.einsum('mnc,np->mpc', b_ref[:, :, cols],
                       params['Theta_pn'].T.astype(c64), precision=hp)
    assert _rel_err(b, b_ref) < 2e-2
    assert _rel_err(f_pol, f_ref) < 2e-2

    print("KERNEL_OK")
</pallas_src>

<mosaic_0001>
module attributes {stable_mosaic.version = 11 : i64} {
  func.func @_l1_kernel(%arg0: memref<2x16x5xf32, #tpu.memory_space<vmem>>, %arg1: memref<16x3xf32, #tpu.memory_space<vmem>>, %arg2: memref<2x16x5x3xf32, #tpu.memory_space<vmem>>) attributes {dimension_semantics = [], scalar_prefetch = 0 : i64, scratch_operands = 0 : i64, tpu.core_type = #tpu.core_type<tc>} {
    %c0 = arith.constant 0 : index
    %c0_0 = arith.constant 0 : index
    %0 = vector.load %arg1[%c0, %c0_0] : memref<16x3xf32, #tpu.memory_space<vmem>>, vector<16x3xf32>
    %c0_1 = arith.constant 0 : index
    %c0_2 = arith.constant 0 : index
    %c0_3 = arith.constant 0 : index
    %1 = vector.load %arg0[%c0_1, %c0_2, %c0_3] : memref<2x16x5xf32, #tpu.memory_space<vmem>>, vector<1x16x5xf32>
    %2 = vector.shape_cast %1 : vector<1x16x5xf32> to vector<16x5xf32>
    %3 = vector.shape_cast %2 : vector<16x5xf32> to vector<16x5x1xf32>
    %4 = vector.shape_cast %0 : vector<16x3xf32> to vector<16x1x3xf32>
    %5 = vector.broadcast %3 : vector<16x5x1xf32> to vector<16x5x3xf32>
    %6 = vector.broadcast %4 : vector<16x1x3xf32> to vector<16x5x3xf32>
    %7 = arith.mulf %5, %6 : vector<16x5x3xf32>
    %c0_4 = arith.constant 0 : index
    %c0_5 = arith.constant 0 : index
    %c0_6 = arith.constant 0 : index
    %c0_7 = arith.constant 0 : index
    %8 = vector.load %arg2[%c0_4, %c0_5, %c0_6, %c0_7] : memref<2x16x5x3xf32, #tpu.memory_space<vmem>>, vector<1x16x5x3xf32>
    %9 = vector.shape_cast %8 : vector<1x16x5x3xf32> to vector<16x5x3xf32>
    %10 = vector.shape_cast %7 : vector<16x5x3xf32> to vector<1x16x5x3xf32>
    tpu.vector_store %arg2[%c0_4, %c0_5, %c0_6, %c0_7], %10 {strides = array<i32>} : memref<2x16x5x3xf32, #tpu.memory_space<vmem>>, vector<1x16x5x3xf32>,
    %c1 = arith.constant 1 : index
    %c0_8 = arith.constant 0 : index
    %c0_9 = arith.constant 0 : index
    %11 = vector.load %arg0[%c1, %c0_8, %c0_9] : memref<2x16x5xf32, #tpu.memory_space<vmem>>, vector<1x16x5xf32>
    %12 = vector.shape_cast %11 : vector<1x16x5xf32> to vector<16x5xf32>
    %13 = vector.shape_cast %12 : vector<16x5xf32> to vector<16x5x1xf32>
    %14 = vector.shape_cast %0 : vector<16x3xf32> to vector<16x1x3xf32>
    %15 = vector.broadcast %13 : vector<16x5x1xf32> to vector<16x5x3xf32>
    %16 = vector.broadcast %14 : vector<16x1x3xf32> to vector<16x5x3xf32>
    %17 = arith.mulf %15, %16 : vector<16x5x3xf32>
    %c1_10 = arith.constant 1 : index
    %c0_11 = arith.constant 0 : index
    %c0_12 = arith.constant 0 : index
    %c0_13 = arith.constant 0 : index
    %18 = vector.load %arg2[%c1_10, %c0_11, %c0_12, %c0_13] : memref<2x16x5x3xf32, #tpu.memory_space<vmem>>, vector<1x16x5x3xf32>
    %19 = vector.shape_cast %18 : vector<1x16x5x3xf32> to vector<16x5x3xf32>
    %20 = vector.shape_cast %17 : vector<16x5x3xf32> to vector<1x16x5x3xf32>
    tpu.vector_store %arg2[%c1_10, %c0_11, %c0_12, %c0_13], %20 {strides = array<i32>} : memref<2x16x5x3xf32, #tpu.memory_space<vmem>>, vector<1x16x5x3xf32>,
    return
  }
}

</mosaic_0001>

<llo_original>
// kernel: tpu_custom_call.1
$region0: #{tpu_custom_call.1}
  #allocation0 [shape = 'u32[]', space=smem, size = 0x4, offset = 0x4, fixed_abs, tag = 'smem constant byte address 0x4 - core index']
  #allocation1 [shape = 'u32[144,128]{1,0:T(1,128)}', space=vmem, size = 0x12000, scoped, tag = 'internal scratch']
  %s0 = inlined_call_operand.vmem [shape: f32[2,16,5], index: 0, kind: input, shape index: {}]
  %s1 = inlined_call_operand.vmem [shape: f32[16,3], index: 1, kind: input, shape index: {}]
  %s2 = inlined_call_operand.vmem [shape: f32[2,16,5,3], index: 2, kind: output, shape index: {}]
  %s3 = sld [smem:[#allocation0]]
  $region18: #{tpu_custom_call.1} parent=0
    _
  %s5 = ssub.s32 1, %s3
  %s6 = scalar_select 0, %s5, %s3
  // Predicated region
  $region2: #{tpu_custom_call.1} parent=0 // pred_check
    _
  $region3: #{tpu_custom_call.1} parent=0 // pred_check_branch
    %8 = sbr.rel (0) target = $region5
  $region4: #{tpu_custom_call.1} parent=0 // pred_region
    _
  $region5: #{tpu_custom_call.1} parent=0 // pred_fallthru
    _
  // Predicated region
  $region6: #{tpu_custom_call.1} parent=0 // pred_check
    _
  $region7: #{tpu_custom_call.1} parent=0 // pred_check_branch
    %10 = sbr.rel (0) target = $region9
  $region8: #{tpu_custom_call.1} parent=0 // pred_region
    _
  $region9: #{tpu_custom_call.1} parent=0 // pred_fallthru
    _
  %v11 = vld [vmem:[%s1] sm:$0xff]
  %v12 = vld [vmem:[%s1 + $0x8] sm:$0xff]
  %v13 = vld [vmem:[%s0] sm:$0xff]
  %v14 = vld [vmem:[%s0 + $0x8] sm:$0xff]
  %v15 = vlaneseq
  %v16 = vshrl.u32 %v15, 7
  %v17 = vsub.s32 0, %v16
  %v18 = vrot.slane %v13, %v17
  %20 = vbcast.lane.b32.xlu0 %v18, 256
  %v21 = vpop.permute.xlu0 %20
  %v22 = vlaneseq
  %v23 = vshrl.u32 %v22, 7
  %v24 = vsub.s32 1, %v23
  %v25 = vrot.slane %v13, %v24
  %27 = vbcast.lane.b32.xlu0 %v25, 256
  %v28 = vpop.permute.xlu0 %27
  %v29 = vlaneseq
  %v30 = vshrl.u32 %v29, 7
  %v31 = vsub.s32 2, %v30
  %v32 = vrot.slane %v13, %v31
  %34 = vbcast.lane.b32.xlu0 %v32, 256
  %v35 = vpop.permute.xlu0 %34
  %v36 = vlaneseq
  %v37 = vshrl.u32 %v36, 7
  %v38 = vsub.s32 3, %v37
  %v39 = vrot.slane %v13, %v38
  %41 = vbcast.lane.b32.xlu0 %v39, 256
  %v42 = vpop.permute.xlu0 %41
  %v43 = vlaneseq
  %v44 = vshrl.u32 %v43, 7
  %v45 = vsub.s32 4, %v44
  %v46 = vrot.slane %v13, %v45
  %48 = vbcast.lane.b32.xlu0 %v46, 256
  %v49 = vpop.permute.xlu0 %48
  %v50 = vlaneseq
  %v51 = vshrl.u32 %v50, 7
  %v52 = vsub.s32 5, %v51
  %v53 = vrot.slane %v13, %v52
  %55 = vbcast.lane.b32.xlu0 %v53, 256
  %v56 = vpop.permute.xlu0 %55
  %v57 = vlaneseq
  %v58 = vshrl.u32 %v57, 7
  %v59 = vsub.s32 6, %v58
  %v60 = vrot.slane %v13, %v59
  %62 = vbcast.lane.b32.xlu0 %v60, 256
  %v63 = vpop.permute.xlu0 %62
  %v64 = vlaneseq
  %v65 = vshrl.u32 %v64, 7
  %v66 = vsub.s32 7, %v65
  %v67 = vrot.slane %v13, %v66
  %69 = vbcast.lane.b32.xlu0 %v67, 256
  %v70 = vpop.permute.xlu0 %69
  %v71 = vlaneseq
  %v72 = vshrl.u32 %v71, 7
  %v73 = vsub.s32 0, %v72
  %v74 = vrot.slane %v14, %v73
  %76 = vbcast.lane.b32.xlu0 %v74, 256
  %v77 = vpop.permute.xlu0 %76
  %v78 = vlaneseq
  %v79 = vshrl.u32 %v78, 7
  %v80 = vsub.s32 1, %v79
  %v81 = vrot.slane %v14, %v80
  %83 = vbcast.lane.b32.xlu0 %v81, 256
  %v84 = vpop.permute.xlu0 %83
  %v85 = vlaneseq
  %v86 = vshrl.u32 %v85, 7
  %v87 = vsub.s32 2, %v86
  %v88 = vrot.slane %v14, %v87
  %90 = vbcast.lane.b32.xlu0 %v88, 256
  %v91 = vpop.permute.xlu0 %90
  %v92 = vlaneseq
  %v93 = vshrl.u32 %v92, 7
  %v94 = vsub.s32 3, %v93
  %v95 = vrot.slane %v14, %v94
  %97 = vbcast.lane.b32.xlu0 %v95, 256
  %v98 = vpop.permute.xlu0 %97
  %v99 = vlaneseq
  %v100 = vshrl.u32 %v99, 7
  %v101 = vsub.s32 4, %v100
  %v102 = vrot.slane %v14, %v101
  %104 = vbcast.lane.b32.xlu0 %v102, 256
  %v105 = vpop.permute.xlu0 %104
  %v106 = vlaneseq
  %v107 = vshrl.u32 %v106, 7
  %v108 = vsub.s32 5, %v107
  %v109 = vrot.slane %v14, %v108
  %111 = vbcast.lane.b32.xlu0 %v109, 256
  %v112 = vpop.permute.xlu0 %111
  %v113 = vlaneseq
  %v114 = vshrl.u32 %v113, 7
  %v115 = vsub.s32 6, %v114
  %v116 = vrot.slane %v14, %v115
  %118 = vbcast.lane.b32.xlu0 %v116, 256
  %v119 = vpop.permute.xlu0 %118
  %v120 = vlaneseq
  %v121 = vshrl.u32 %v120, 7
  %v122 = vsub.s32 7, %v121
  %v123 = vrot.slane %v14, %v122
  %125 = vbcast.lane.b32.xlu0 %v123, 256
  %v126 = vpop.permute.xlu0 %125
  %v129 = vcombine.high %v11, %v11
  %v131 = vunpack.c.l.s4 1966171168
  %v132 = vunpack.c.0.s8 %v131
  %v133 = vlaneseq
  %v134 = vshrl.u32 %v133, 7
  %v135 = vsub.s32 %v132, %v134
  %v136 = vrot.slane %v11, %v135
  %v138 = vunpack.c.l.s4 1966171168
  %v139 = vunpack.c.0.s8 %v138
  %v140 = vlaneseq
  %v141 = vshrl.u32 %v140, 7
  %v142 = vsub.s32 %v139, %v141
  %v143 = vrot.slane %v129, %v142
  %v144 = vcombine.high %v136, %v136
  %v145 = vcombine.high %v143, %v143
  %v147 = vunpack.c.l.s4 1966171168
  %v148 = vunpack.c.0.s8 %v147
  %v149 = vlaneseq
  %v150 = vshrl.u32 %v149, 7
  %v151 = vsub.s32 %v148, %v150
  %v152 = vrot.slane %v136, %v151
  %v154 = vunpack.c.l.s4 1966171168
  %v155 = vunpack.c.0.s8 %v154
  %v156 = vlaneseq
  %v157 = vshrl.u32 %v156, 7
  %v158 = vsub.s32 %v155, %v157
  %v159 = vrot.slane %v143, %v158
  %v161 = vunpack.c.l.s4 1966171168
  %v162 = vunpack.c.0.s8 %v161
  %v163 = vlaneseq
  %v164 = vshrl.u32 %v163, 7
  %v165 = vsub.s32 %v162, %v164
  %v166 = vrot.slane %v144, %v165
  %v168 = vunpack.c.l.s4 1966171168
  %v169 = vunpack.c.0.s8 %v168
  %v170 = vlaneseq
  %v171 = vshrl.u32 %v170, 7
  %v172 = vsub.s32 %v169, %v171
  %v173 = vrot.slane %v145, %v172
  %v174 = vcombine.high %v152, %v152
  %v175 = vcombine.high %v159, %v159
  %v176 = vcombine.high %v166, %v166
  %v177 = vcombine.high %v173, %v173
  %v178 = vcombine.high %v12, %v12
  %v180 = vunpack.c.l.s4 1966171168
  %v181 = vunpack.c.0.s8 %v180
  %v182 = vlaneseq
  %v183 = vshrl.u32 %v182, 7
  %v184 = vsub.s32 %v181, %v183
  %v185 = vrot.slane %v12, %v184
  %v187 = vunpack.c.l.s4 1966171168
  %v188 = vunpack.c.0.s8 %v187
  %v189 = vlaneseq
  %v190 = vshrl.u32 %v189, 7
  %v191 = vsub.s32 %v188, %v190
  %v192 = vrot.slane %v178, %v191
  %v193 = vcombine.high %v185, %v185
  %v194 = vcombine.high %v192, %v192
  %v196 = vunpack.c.l.s4 1966171168
  %v197 = vunpack.c.0.s8 %v196
  %v198 = vlaneseq
  %v199 = vshrl.u32 %v198, 7
  %v200 = vsub.s32 %v197, %v199
  %v201 = vrot.slane %v185, %v200
  %v203 = vunpack.c.l.s4 1966171168
  %v204 = vunpack.c.0.s8 %v203
  %v205 = vlaneseq
  %v206 = vshrl.u32 %v205, 7
  %v207 = vsub.s32 %v204, %v206
  %v208 = vrot.slane %v192, %v207
  %v210 = vunpack.c.l.s4 1966171168
  %v211 = vunpack.c.0.s8 %v210
  %v212 = vlaneseq
  %v213 = vshrl.u32 %v212, 7
  %v214 = vsub.s32 %v211, %v213
  %v215 = vrot.slane %v193, %v214
  %v217 = vunpack.c.l.s4 1966171168
  %v218 = vunpack.c.0.s8 %v217
  %v219 = vlaneseq
  %v220 = vshrl.u32 %v219, 7
  %v221 = vsub.s32 %v218, %v220
  %v222 = vrot.slane %v194, %v221
  %v223 = vcombine.high %v201, %v201
  %v224 = vcombine.high %v208, %v208
  %v225 = vcombine.high %v215, %v215
  %v226 = vcombine.high %v222, %v222
  %v227 = vlaneseq
  %v228 = vshrl.u32 %v227, 7
  %v229 = vsub.s32 0, %v228
  %v230 = vrot.slane %v152, %v229
  %v231 = vlaneseq
  %v232 = vshrl.u32 %v231, 7
  %v233 = vsub.s32 0, %v232
  %v234 = vrot.slane %v166, %v233
  %v235 = vlaneseq
  %v236 = vshrl.u32 %v235, 7
  %v237 = vsub.s32 0, %v236
  %v238 = vrot.slane %v174, %v237
  %v239 = vlaneseq
  %v240 = vshrl.u32 %v239, 7
  %v241 = vsub.s32 0, %v240
  %v242 = vrot.slane %v176, %v241
  %v243 = vlaneseq
  %v244 = vshrl.u32 %v243, 7
  %v245 = vsub.s32 0, %v244
  %v246 = vrot.slane %v159, %v245
  %v247 = vlaneseq
  %v248 = vshrl.u32 %v247, 7
  %v249 = vsub.s32 0, %v248
  %v250 = vrot.slane %v173, %v249
  %v251 = vlaneseq
  %v252 = vshrl.u32 %v251, 7
  %v253 = vsub.s32 0, %v252
  %v254 = vrot.slane %v175, %v253
  %v255 = vlaneseq
  %v256 = vshrl.u32 %v255, 7
  %v257 = vsub.s32 0, %v256
  %v258 = vrot.slane %v177, %v257
  %v259 = vlaneseq
  %v260 = vshrl.u32 %v259, 7
  %v261 = vsub.s32 0, %v260
  %v262 = vrot.slane %v201, %v261
  %v263 = vlaneseq
  %v264 = vshrl.u32 %v263, 7
  %v265 = vsub.s32 0, %v264
  %v266 = vrot.slane %v215, %v265
  %v267 = vlaneseq
  %v268 = vshrl.u32 %v267, 7
  %v269 = vsub.s32 0, %v268
  %v270 = vrot.slane %v223, %v269
  %v271 = vlaneseq
  %v272 = vshrl.u32 %v271, 7
  %v273 = vsub.s32 0, %v272
  %v274 = vrot.slane %v225, %v273
  %v275 = vlaneseq
  %v276 = vshrl.u32 %v275, 7
  %v277 = vsub.s32 0, %v276
  %v278 = vrot.slane %v208, %v277
  %v279 = vlaneseq
  %v280 = vshrl.u32 %v279, 7
  %v281 = vsub.s32 0, %v280
  %v282 = vrot.slane %v222, %v281
  %v283 = vlaneseq
  %v284 = vshrl.u32 %v283, 7
  %v285 = vsub.s32 0, %v284
  %v286 = vrot.slane %v224, %v285
  %v287 = vlaneseq
  %v288 = vshrl.u32 %v287, 7
  %v289 = vsub.s32 0, %v288
  %v290 = vrot.slane %v226, %v289
  %v307 = vmul.f32 %v21, %v230
  %v308 = vmul.f32 %v28, %v234
  %v309 = vmul.f32 %v35, %v238
  %v310 = vmul.f32 %v42, %v242
  %v311 = vmul.f32 %v49, %v246
  %v312 = vmul.f32 %v56, %v250
  %v313 = vmul.f32 %v63, %v254
  %v314 = vmul.f32 %v70, %v258
  %v315 = vmul.f32 %v77, %v262
  %v316 = vmul.f32 %v84, %v266
  %v317 = vmul.f32 %v91, %v270
  %v318 = vmul.f32 %v98, %v274
  %v319 = vmul.f32 %v105, %v278
  %v320 = vmul.f32 %v112, %v282
  %v321 = vmul.f32 %v119, %v286
  %v322 = vmul.f32 %v126, %v290
  %vm323 = vcmask 20480
  %324 = vst.msk [vmem:[%s2] sm:$0x1f] %vm323, %v307
  %325 = vst.msk [vmem:[%s2 + $0x8] sm:$0x1f] %vm323, %v308
  %326 = vst.msk [vmem:[%s2 + $0x10] sm:$0x1f] %vm323, %v309
  %327 = vst.msk [vmem:[%s2 + $0x18] sm:$0x1f] %vm323, %v310
  %328 = vst.msk [vmem:[%s2 + $0x20] sm:$0x1f] %vm323, %v311
  %329 = vst.msk [vmem:[%s2 + $0x28] sm:$0x1f] %vm323, %v312
  %330 = vst.msk [vmem:[%s2 + $0x30] sm:$0x1f] %vm323, %v313
  %331 = vst.msk [vmem:[%s2 + $0x38] sm:$0x1f] %vm323, %v314
  %332 = vst.msk [vmem:[%s2 + $0x40] sm:$0x1f] %vm323, %v315
  %333 = vst.msk [vmem:[%s2 + $0x48] sm:$0x1f] %vm323, %v316
  %334 = vst.msk [vmem:[%s2 + $0x50] sm:$0x1f] %vm323, %v317
  %335 = vst.msk [vmem:[%s2 + $0x58] sm:$0x1f] %vm323, %v318
  %336 = vst.msk [vmem:[%s2 + $0x60] sm:$0x1f] %vm323, %v319
  %337 = vst.msk [vmem:[%s2 + $0x68] sm:$0x1f] %vm323, %v320
  %338 = vst.msk [vmem:[%s2 + $0x70] sm:$0x1f] %vm323, %v321
  %339 = vst.msk [vmem:[%s2 + $0x78] sm:$0x1f] %vm323, %v322
  %s340 = scalar_lea.vmem %s0, 16
  %v341 = vld [vmem:[%s340] sm:$0xff]
  %v342 = vld [vmem:[%s340 + $0x8] sm:$0xff]
  %v343 = vlaneseq
  %v344 = vshrl.u32 %v343, 7
  %v345 = vsub.s32 0, %v344
  %v346 = vrot.slane %v341, %v345
  %348 = vbcast.lane.b32.xlu0 %v346, 256
  %v349 = vpop.permute.xlu0 %348
  %v350 = vlaneseq
  %v351 = vshrl.u32 %v350, 7
  %v352 = vsub.s32 1, %v351
  %v353 = vrot.slane %v341, %v352
  %355 = vbcast.lane.b32.xlu0 %v353, 256
  %v356 = vpop.permute.xlu0 %355
  %v357 = vlaneseq
  %v358 = vshrl.u32 %v357, 7
  %v359 = vsub.s32 2, %v358
  %v360 = vrot.slane %v341, %v359
  %362 = vbcast.lane.b32.xlu0 %v360, 256
  %v363 = vpop.permute.xlu0 %362
  %v364 = vlaneseq
  %v365 = vshrl.u32 %v364, 7
  %v366 = vsub.s32 3, %v365
  %v367 = vrot.slane %v341, %v366
  %369 = vbcast.lane.b32.xlu0 %v367, 256
  %v370 = vpop.permute.xlu0 %369
  %v371 = vlaneseq
  %v372 = vshrl.u32 %v371, 7
  %v373 = vsub.s32 4, %v372
  %v374 = vrot.slane %v341, %v373
  %376 = vbcast.lane.b32.xlu0 %v374, 256
  %v377 = vpop.permute.xlu0 %376
  %v378 = vlaneseq
  %v379 = vshrl.u32 %v378, 7
  %v380 = vsub.s32 5, %v379
  %v381 = vrot.slane %v341, %v380
  %383 = vbcast.lane.b32.xlu0 %v381, 256
  %v384 = vpop.permute.xlu0 %383
  %v385 = vlaneseq
  %v386 = vshrl.u32 %v385, 7
  %v387 = vsub.s32 6, %v386
  %v388 = vrot.slane %v341, %v387
  %390 = vbcast.lane.b32.xlu0 %v388, 256
  %v391 = vpop.permute.xlu0 %390
  %v392 = vlaneseq
  %v393 = vshrl.u32 %v392, 7
  %v394 = vsub.s32 7, %v393
  %v395 = vrot.slane %v341, %v394
  %397 = vbcast.lane.b32.xlu0 %v395, 256
  %v398 = vpop.permute.xlu0 %397
  %v399 = vlaneseq
  %v400 = vshrl.u32 %v399, 7
  %v401 = vsub.s32 0, %v400
  %v402 = vrot.slane %v342, %v401
  %404 = vbcast.lane.b32.xlu0 %v402, 256
  %v405 = vpop.permute.xlu0 %404
  %v406 = vlaneseq
  %v407 = vshrl.u32 %v406, 7
  %v408 = vsub.s32 1, %v407
  %v409 = vrot.slane %v342, %v408
  %411 = vbcast.lane.b32.xlu0 %v409, 256
  %v412 = vpop.permute.xlu0 %411
  %v413 = vlaneseq
  %v414 = vshrl.u32 %v413, 7
  %v415 = vsub.s32 2, %v414
  %v416 = vrot.slane %v342, %v415
  %418 = vbcast.lane.b32.xlu0 %v416, 256
  %v419 = vpop.permute.xlu0 %418
  %v420 = vlaneseq
  %v421 = vshrl.u32 %v420, 7
  %v422 = vsub.s32 3, %v421
  %v423 = vrot.slane %v342, %v422
  %425 = vbcast.lane.b32.xlu0 %v423, 256
  %v426 = vpop.permute.xlu0 %425
  %v427 = vlaneseq
  %v428 = vshrl.u32 %v427, 7
  %v429 = vsub.s32 4, %v428
  %v430 = vrot.slane %v342, %v429
  %432 = vbcast.lane.b32.xlu0 %v430, 256
  %v433 = vpop.permute.xlu0 %432
  %v434 = vlaneseq
  %v435 = vshrl.u32 %v434, 7
  %v436 = vsub.s32 5, %v435
  %v437 = vrot.slane %v342, %v436
  %439 = vbcast.lane.b32.xlu0 %v437, 256
  %v440 = vpop.permute.xlu0 %439
  %v441 = vlaneseq
  %v442 = vshrl.u32 %v441, 7
  %v443 = vsub.s32 6, %v442
  %v444 = vrot.slane %v342, %v443
  %446 = vbcast.lane.b32.xlu0 %v444, 256
  %v447 = vpop.permute.xlu0 %446
  %v448 = vlaneseq
  %v449 = vshrl.u32 %v448, 7
  %v450 = vsub.s32 7, %v449
  %v451 = vrot.slane %v342, %v450
  %453 = vbcast.lane.b32.xlu0 %v451, 256
  %v454 = vpop.permute.xlu0 %453
  %v455 = vmul.f32 %v349, %v230
  %v456 = vmul.f32 %v356, %v234
  %v457 = vmul.f32 %v363, %v238
  %v458 = vmul.f32 %v370, %v242
  %v459 = vmul.f32 %v377, %v246
  %v460 = vmul.f32 %v384, %v250
  %v461 = vmul.f32 %v391, %v254
  %v462 = vmul.f32 %v398, %v258
  %v463 = vmul.f32 %v405, %v262
  %v464 = vmul.f32 %v412, %v266
  %v465 = vmul.f32 %v419, %v270
  %v466 = vmul.f32 %v426, %v274
  %v467 = vmul.f32 %v433, %v278
  %v468 = vmul.f32 %v440, %v282
  %v469 = vmul.f32 %v447, %v286
  %v470 = vmul.f32 %v454, %v290
  %s471 = scalar_lea.vmem %s2, 128
  %472 = vst.msk [vmem:[%s471] sm:$0x1f] %vm323, %v455
  %473 = vst.msk [vmem:[%s471 + $0x8] sm:$0x1f] %vm323, %v456
  %474 = vst.msk [vmem:[%s471 + $0x10] sm:$0x1f] %vm323, %v457
  %475 = vst.msk [vmem:[%s471 + $0x18] sm:$0x1f] %vm323, %v458
  %476 = vst.msk [vmem:[%s471 + $0x20] sm:$0x1f] %vm323, %v459
  %477 = vst.msk [vmem:[%s471 + $0x28] sm:$0x1f] %vm323, %v460
  %478 = vst.msk [vmem:[%s471 + $0x30] sm:$0x1f] %vm323, %v461
  %479 = vst.msk [vmem:[%s471 + $0x38] sm:$0x1f] %vm323, %v462
  %480 = vst.msk [vmem:[%s471 + $0x40] sm:$0x1f] %vm323, %v463
  %481 = vst.msk [vmem:[%s471 + $0x48] sm:$0x1f] %vm323, %v464
  %482 = vst.msk [vmem:[%s471 + $0x50] sm:$0x1f] %vm323, %v465
  %483 = vst.msk [vmem:[%s471 + $0x58] sm:$0x1f] %vm323, %v466
  %484 = vst.msk [vmem:[%s471 + $0x60] sm:$0x1f] %vm323, %v467
  %485 = vst.msk [vmem:[%s471 + $0x68] sm:$0x1f] %vm323, %v468
  %486 = vst.msk [vmem:[%s471 + $0x70] sm:$0x1f] %vm323, %v469
  %487 = vst.msk [vmem:[%s471 + $0x78] sm:$0x1f] %vm323, %v470
  // Predicated region
  $region10: #{tpu_custom_call.1} parent=0 // pred_check
    _
  $region11: #{tpu_custom_call.1} parent=0 // pred_check_branch
    %489 = sbr.rel (0) target = $region13
  $region12: #{tpu_custom_call.1} parent=0 // pred_region
    _
  $region13: #{tpu_custom_call.1} parent=0 // pred_fallthru
    _
  // Predicated region
  $region14: #{tpu_custom_call.1} parent=0 // pred_check
    _
  $region15: #{tpu_custom_call.1} parent=0 // pred_check_branch
    %491 = sbr.rel (0) target = $region17
  $region16: #{tpu_custom_call.1} parent=0 // pred_region
    _
  $region17: #{tpu_custom_call.1} parent=0 // pred_fallthru
    _

</llo_original>
